<compile_context>
chip_gen: v6e
topology: v6e:2x2x1
jax: 0.10.0
libtpu: 0.0.40
codegen_flags: <defaults>
</compile_context>

<pallas_src>
import jax
import jax.numpy as jnp
from jax.experimental import pallas as pl
from jax.experimental.pallas import tpu as pltpu


def _scatter_kernel(idx_ref, in_ref, out_ref):
    """Scatter packed-u32 rows of in_ref into out_ref at rows idx_ref[i].

    idx_ref : SMEM (N,)                  int32   (scalar-prefetch operand)
    in_ref  : VMEM (N, lane_block)       uint32  (bf16 pairs packed as u32)
    out_ref : VMEM (out_rows, lane_block) uint32
    """
    # Zero-init this output lane-block directly in its native 32-bit dtype
    # (no f32 shadow of the output, no final cast/copy pass).
    out_ref[...] = jnp.zeros_like(out_ref)

    n_rows = in_ref.shape[0]
    out_rows = out_ref.shape[0]

    def body(i, carry):
        # Scalar-unit index read happens before the (store-bound) vector work.
        dst = idx_ref[i]

        # VMEM stores have no runtime bounds check: silently drop rows whose
        # destination is out of range instead of corrupting adjacent memory.
        @pl.when(jnp.logical_and(dst >= 0, dst < out_rows))
        def _():
            # dynamic single-row 32-bit store: output[dst, :] = input[i, :]
            out_ref[pl.ds(dst, 1), :] = in_ref[pl.ds(i, 1), :]

        return carry

    # Bounded unroll: keeps LLO scheduling visibility (hides SMEM read +
    # masked-store latency) without vreg/code-size blow-up at large N.
    jax.lax.fori_loop(0, n_rows, body, 0, unroll=max(1, min(8, n_rows)))


def custom_scatter_bf16(input_, indices, output_size, n_tpc=1):
    """JAX/Pallas equivalent of CustomScatter.forward (bf16 row scatter)."""
    assert indices.ndim == 1, "[Indices] Not support more than 1 dimensions"
    assert input_.ndim == 2
    # TODO(synk): n_tpc is a Gaudi TPC-count parallelism hint with no semantic
    # effect; TPU parallelism is expressed via the lane-dim grid below instead.
    del n_tpc

    n_rows, d = input_.shape
    assert d % 2 == 0, "bf16 feature dim must be even to pack pairs into u32"

    indices = indices.astype(jnp.int32)
    input_bf16 = input_.astype(jnp.bfloat16)

    # Pack bf16 pairs into u32 in the wrapper (pure bit view) so the kernel
    # issues clean 32-bit dynamic sublane stores — no packed-bf16 store issues
    # and no f32 staging copy of the whole output.
    w = d // 2
    input_u32 = jax.lax.bitcast_convert_type(
        input_bf16.reshape(n_rows, w, 2), jnp.uint32
    )

    # Tile the packed lane dimension: bounds the per-step VMEM footprint
    # (input slab + output slab only; matters on v7x's 64 MiB VMEM) and gives
    # a "parallel" grid axis that v7x's two TensorCores can split.
    if w % 128 == 0:
        lane_block = min(w, 512)
    else:
        lane_block = w  # full width (last dim must be mult-of-128 or full)
    grid = (pl.cdiv(w, lane_block),)

    # TODO(synk): for output_size so large that (output_size, lane_block) no
    # longer fits VMEM, switch to a per-row output BlockSpec driven by the
    # prefetched indices (out index_map -> (idx[i], 0)) with
    # input_output_aliases onto a pre-zeroed output.
    grid_spec = pltpu.PrefetchScalarGridSpec(
        num_scalar_prefetch=1,  # indices land in SMEM before the grid runs
        grid=grid,
        in_specs=[
            pl.BlockSpec((n_rows, lane_block), lambda j, idx_ref: (0, j)),
        ],
        out_specs=pl.BlockSpec(
            (output_size, lane_block), lambda j, idx_ref: (0, j)
        ),
    )

    out_u32 = pl.pallas_call(
        _scatter_kernel,
        out_shape=jax.ShapeDtypeStruct((output_size, w), jnp.uint32),
        grid_spec=grid_spec,
        compiler_params=pltpu.CompilerParams(
            dimension_semantics=("parallel",)
        ),
    )(indices, input_u32)

    # Unpack u32 -> bf16 pairs in the wrapper (bit-exact view change).
    out_bf16 = jax.lax.bitcast_convert_type(out_u32, jnp.bfloat16)
    return out_bf16.reshape(output_size, d)


if __name__ == "__main__":
    key = jax.random.PRNGKey(0)
    k_in, k_idx = jax.random.split(key)

    N, D = 8, 256          # rows to scatter, feature width (lane-aligned)
    OUTPUT_SIZE = 16       # output rows
    N_TPC = 8              # Gaudi parallelism hint (ignored)

    input_ = jax.random.normal(k_in, (N, D), dtype=jnp.float32).astype(jnp.bfloat16)
    # unique destination rows (so reference semantics are unambiguous; with
    # duplicates the kernel is deterministically last-write-wins, while the
    # jnp .at[].set reference makes no ordering guarantee)
    indices = jax.random.permutation(k_idx, OUTPUT_SIZE)[:N].astype(jnp.int32)

    out = custom_scatter_bf16(input_, indices, OUTPUT_SIZE, N_TPC)
    out = jax.block_until_ready(out)

    # reference: scatter rows into a zero output
    ref = jnp.zeros((OUTPUT_SIZE, D), jnp.bfloat16).at[indices].set(input_)

    assert out.shape == (OUTPUT_SIZE, D)
    assert out.dtype == jnp.bfloat16
    assert jnp.array_equal(
        out.astype(jnp.float32), ref.astype(jnp.float32)
    ), "scatter result mismatch"

    print("KERNEL_OK")
</pallas_src>

<mosaic_0001>
module attributes {stable_mosaic.version = 11 : i64} {
  func.func @_scatter_kernel(%arg0: i32, %arg1: memref<8xi32, #tpu.memory_space<smem>>, %arg2: memref<8x128xi32, #tpu.memory_space<vmem>>, %arg3: memref<16x128xi32, #tpu.memory_space<vmem>>) attributes {dimension_semantics = [#tpu.dimension_semantics<parallel>], iteration_bounds = array<i64: 1>, scalar_prefetch = 1 : i64, scratch_operands = 0 : i64, tpu.core_type = #tpu.core_type<tc>, window_params = [{transform_indices = @transform_0, window_bounds = array<i64: 8, 128>}, {transform_indices = @transform_1, window_bounds = array<i64: 16, 128>}]} {
    %c0_i32 = arith.constant 0 : i32
    %0 = vector.broadcast %c0_i32 : i32 to vector<16x128xi32>
    %c0 = arith.constant 0 : index
    %c0_0 = arith.constant 0 : index
    %1 = vector.load %arg3[%c0, %c0_0] : memref<16x128xi32, #tpu.memory_space<vmem>>, vector<16x128xi32>
    tpu.vector_store %arg3[%c0, %c0_0], %0 {strides = array<i32>} : memref<16x128xi32, #tpu.memory_space<vmem>>, vector<16x128xi32>,
    %c0_i32_1 = arith.constant 0 : i32
    %2 = arith.index_cast %c0_i32_1 : i32 to index
    %3 = memref.load %arg1[%2] : memref<8xi32, #tpu.memory_space<smem>>
    %c0_i32_2 = arith.constant 0 : i32
    %4 = arith.cmpi sge, %3, %c0_i32_2 : i32
    %c16_i32 = arith.constant 16 : i32
    %5 = arith.cmpi slt, %3, %c16_i32 : i32
    %6 = arith.andi %4, %5 : i1
    %7 = arith.extui %6 : i1 to i32
    %c0_i32_3 = arith.constant 0 : i32
    %8 = arith.cmpi ne, %7, %c0_i32_3 : i32
    scf.if %8 {
      %58 = arith.index_cast %c0_i32_1 : i32 to index
      %c0_25 = arith.constant 0 : index
      %59 = vector.load %arg2[%58, %c0_25] : memref<8x128xi32, #tpu.memory_space<vmem>>, vector<1x128xi32>
      %60 = arith.index_cast %3 : i32 to index
      %c0_26 = arith.constant 0 : index
      %61 = vector.load %arg3[%60, %c0_26] : memref<16x128xi32, #tpu.memory_space<vmem>>, vector<1x128xi32>
      tpu.vector_store %arg3[%60, %c0_26], %59 {strides = array<i32>} : memref<16x128xi32, #tpu.memory_space<vmem>>, vector<1x128xi32>,
    } else {
    }
    %c1_i32 = arith.constant 1 : i32
    %9 = arith.index_cast %c1_i32 : i32 to index
    %10 = memref.load %arg1[%9] : memref<8xi32, #tpu.memory_space<smem>>
    %c0_i32_4 = arith.constant 0 : i32
    %11 = arith.cmpi sge, %10, %c0_i32_4 : i32
    %c16_i32_5 = arith.constant 16 : i32
    %12 = arith.cmpi slt, %10, %c16_i32_5 : i32
    %13 = arith.andi %11, %12 : i1
    %14 = arith.extui %13 : i1 to i32
    %c0_i32_6 = arith.constant 0 : i32
    %15 = arith.cmpi ne, %14, %c0_i32_6 : i32
    scf.if %15 {
      %58 = arith.index_cast %c1_i32 : i32 to index
      %c0_25 = arith.constant 0 : index
      %59 = vector.load %arg2[%58, %c0_25] : memref<8x128xi32, #tpu.memory_space<vmem>>, vector<1x128xi32>
      %60 = arith.index_cast %10 : i32 to index
      %c0_26 = arith.constant 0 : index
      %61 = vector.load %arg3[%60, %c0_26] : memref<16x128xi32, #tpu.memory_space<vmem>>, vector<1x128xi32>
      tpu.vector_store %arg3[%60, %c0_26], %59 {strides = array<i32>} : memref<16x128xi32, #tpu.memory_space<vmem>>, vector<1x128xi32>,
    } else {
    }
    %c2_i32 = arith.constant 2 : i32
    %16 = arith.index_cast %c2_i32 : i32 to index
    %17 = memref.load %arg1[%16] : memref<8xi32, #tpu.memory_space<smem>>
    %c0_i32_7 = arith.constant 0 : i32
    %18 = arith.cmpi sge, %17, %c0_i32_7 : i32
    %c16_i32_8 = arith.constant 16 : i32
    %19 = arith.cmpi slt, %17, %c16_i32_8 : i32
    %20 = arith.andi %18, %19 : i1
    %21 = arith.extui %20 : i1 to i32
    %c0_i32_9 = arith.constant 0 : i32
    %22 = arith.cmpi ne, %21, %c0_i32_9 : i32
    scf.if %22 {
      %58 = arith.index_cast %c2_i32 : i32 to index
      %c0_25 = arith.constant 0 : index
      %59 = vector.load %arg2[%58, %c0_25] : memref<8x128xi32, #tpu.memory_space<vmem>>, vector<1x128xi32>
      %60 = arith.index_cast %17 : i32 to index
      %c0_26 = arith.constant 0 : index
      %61 = vector.load %arg3[%60, %c0_26] : memref<16x128xi32, #tpu.memory_space<vmem>>, vector<1x128xi32>
      tpu.vector_store %arg3[%60, %c0_26], %59 {strides = array<i32>} : memref<16x128xi32, #tpu.memory_space<vmem>>, vector<1x128xi32>,
    } else {
    }
    %c3_i32 = arith.constant 3 : i32
    %23 = arith.index_cast %c3_i32 : i32 to index
    %24 = memref.load %arg1[%23] : memref<8xi32, #tpu.memory_space<smem>>
    %c0_i32_10 = arith.constant 0 : i32
    %25 = arith.cmpi sge, %24, %c0_i32_10 : i32
    %c16_i32_11 = arith.constant 16 : i32
    %26 = arith.cmpi slt, %24, %c16_i32_11 : i32
    %27 = arith.andi %25, %26 : i1
    %28 = arith.extui %27 : i1 to i32
    %c0_i32_12 = arith.constant 0 : i32
    %29 = arith.cmpi ne, %28, %c0_i32_12 : i32
    scf.if %29 {
      %58 = arith.index_cast %c3_i32 : i32 to index
      %c0_25 = arith.constant 0 : index
      %59 = vector.load %arg2[%58, %c0_25] : memref<8x128xi32, #tpu.memory_space<vmem>>, vector<1x128xi32>
      %60 = arith.index_cast %24 : i32 to index
      %c0_26 = arith.constant 0 : index
      %61 = vector.load %arg3[%60, %c0_26] : memref<16x128xi32, #tpu.memory_space<vmem>>, vector<1x128xi32>
      tpu.vector_store %arg3[%60, %c0_26], %59 {strides = array<i32>} : memref<16x128xi32, #tpu.memory_space<vmem>>, vector<1x128xi32>,
    } else {
    }
    %c4_i32 = arith.constant 4 : i32
    %30 = arith.index_cast %c4_i32 : i32 to index
    %31 = memref.load %arg1[%30] : memref<8xi32, #tpu.memory_space<smem>>
    %c0_i32_13 = arith.constant 0 : i32
    %32 = arith.cmpi sge, %31, %c0_i32_13 : i32
    %c16_i32_14 = arith.constant 16 : i32
    %33 = arith.cmpi slt, %31, %c16_i32_14 : i32
    %34 = arith.andi %32, %33 : i1
    %35 = arith.extui %34 : i1 to i32
    %c0_i32_15 = arith.constant 0 : i32
    %36 = arith.cmpi ne, %35, %c0_i32_15 : i32
    scf.if %36 {
      %58 = arith.index_cast %c4_i32 : i32 to index
      %c0_25 = arith.constant 0 : index
      %59 = vector.load %arg2[%58, %c0_25] : memref<8x128xi32, #tpu.memory_space<vmem>>, vector<1x128xi32>
      %60 = arith.index_cast %31 : i32 to index
      %c0_26 = arith.constant 0 : index
      %61 = vector.load %arg3[%60, %c0_26] : memref<16x128xi32, #tpu.memory_space<vmem>>, vector<1x128xi32>
      tpu.vector_store %arg3[%60, %c0_26], %59 {strides = array<i32>} : memref<16x128xi32, #tpu.memory_space<vmem>>, vector<1x128xi32>,
    } else {
    }
    %c5_i32 = arith.constant 5 : i32
    %37 = arith.index_cast %c5_i32 : i32 to index
    %38 = memref.load %arg1[%37] : memref<8xi32, #tpu.memory_space<smem>>
    %c0_i32_16 = arith.constant 0 : i32
    %39 = arith.cmpi sge, %38, %c0_i32_16 : i32
    %c16_i32_17 = arith.constant 16 : i32
    %40 = arith.cmpi slt, %38, %c16_i32_17 : i32
    %41 = arith.andi %39, %40 : i1
    %42 = arith.extui %41 : i1 to i32
    %c0_i32_18 = arith.constant 0 : i32
    %43 = arith.cmpi ne, %42, %c0_i32_18 : i32
    scf.if %43 {
      %58 = arith.index_cast %c5_i32 : i32 to index
      %c0_25 = arith.constant 0 : index
      %59 = vector.load %arg2[%58, %c0_25] : memref<8x128xi32, #tpu.memory_space<vmem>>, vector<1x128xi32>
      %60 = arith.index_cast %38 : i32 to index
      %c0_26 = arith.constant 0 : index
      %61 = vector.load %arg3[%60, %c0_26] : memref<16x128xi32, #tpu.memory_space<vmem>>, vector<1x128xi32>
      tpu.vector_store %arg3[%60, %c0_26], %59 {strides = array<i32>} : memref<16x128xi32, #tpu.memory_space<vmem>>, vector<1x128xi32>,
    } else {
    }
    %c6_i32 = arith.constant 6 : i32
    %44 = arith.index_cast %c6_i32 : i32 to index
    %45 = memref.load %arg1[%44] : memref<8xi32, #tpu.memory_space<smem>>
    %c0_i32_19 = arith.constant 0 : i32
    %46 = arith.cmpi sge, %45, %c0_i32_19 : i32
    %c16_i32_20 = arith.constant 16 : i32
    %47 = arith.cmpi slt, %45, %c16_i32_20 : i32
    %48 = arith.andi %46, %47 : i1
    %49 = arith.extui %48 : i1 to i32
    %c0_i32_21 = arith.constant 0 : i32
    %50 = arith.cmpi ne, %49, %c0_i32_21 : i32
    scf.if %50 {
      %58 = arith.index_cast %c6_i32 : i32 to index
      %c0_25 = arith.constant 0 : index
      %59 = vector.load %arg2[%58, %c0_25] : memref<8x128xi32, #tpu.memory_space<vmem>>, vector<1x128xi32>
      %60 = arith.index_cast %45 : i32 to index
      %c0_26 = arith.constant 0 : index
      %61 = vector.load %arg3[%60, %c0_26] : memref<16x128xi32, #tpu.memory_space<vmem>>, vector<1x128xi32>
      tpu.vector_store %arg3[%60, %c0_26], %59 {strides = array<i32>} : memref<16x128xi32, #tpu.memory_space<vmem>>, vector<1x128xi32>,
    } else {
    }
    %c7_i32 = arith.constant 7 : i32
    %51 = arith.index_cast %c7_i32 : i32 to index
    %52 = memref.load %arg1[%51] : memref<8xi32, #tpu.memory_space<smem>>
    %c0_i32_22 = arith.constant 0 : i32
    %53 = arith.cmpi sge, %52, %c0_i32_22 : i32
    %c16_i32_23 = arith.constant 16 : i32
    %54 = arith.cmpi slt, %52, %c16_i32_23 : i32
    %55 = arith.andi %53, %54 : i1
    %56 = arith.extui %55 : i1 to i32
    %c0_i32_24 = arith.constant 0 : i32
    %57 = arith.cmpi ne, %56, %c0_i32_24 : i32
    scf.if %57 {
      %58 = arith.index_cast %c7_i32 : i32 to index
      %c0_25 = arith.constant 0 : index
      %59 = vector.load %arg2[%58, %c0_25] : memref<8x128xi32, #tpu.memory_space<vmem>>, vector<1x128xi32>
      %60 = arith.index_cast %52 : i32 to index
      %c0_26 = arith.constant 0 : index
      %61 = vector.load %arg3[%60, %c0_26] : memref<16x128xi32, #tpu.memory_space<vmem>>, vector<1x128xi32>
      tpu.vector_store %arg3[%60, %c0_26], %59 {strides = array<i32>} : memref<16x128xi32, #tpu.memory_space<vmem>>, vector<1x128xi32>,
    } else {
    }
    %c8_i32 = arith.constant 8 : i32
    return
  }
  func.func @transform_0(%arg0: i32, %arg1: memref<8xi32, #tpu.memory_space<smem>>) -> (i32, i32) {
    %c0_i32 = arith.constant 0 : i32
    %c0_i32_0 = arith.constant 0 : i32
    return %c0_i32, %arg0 : i32, i32
  }
  func.func @transform_1(%arg0: i32, %arg1: memref<8xi32, #tpu.memory_space<smem>>) -> (i32, i32) {
    %c0_i32 = arith.constant 0 : i32
    %c0_i32_0 = arith.constant 0 : i32
    return %c0_i32, %arg0 : i32, i32
  }
}

</mosaic_0001>

<llo_original>
// kernel: tpu_custom_call.1
$region0: #{tpu_custom_call.1}
  #allocation0 [shape = 'u32[]', space=smem, size = 0x4, offset = 0x4, fixed_abs, tag = 'smem constant byte address 0x4 - core index']
  #allocation1 [shape = 'u32[144,128]{1,0:T(1,128)}', space=vmem, size = 0x12000, scoped, tag = 'internal scratch']
  #allocation2 [shape = 's32[1]{0}', space=sflag, size = 0x4, scoped, tag = 'scoped memory for tpu_custom_call.1']
  #allocation3 [shape = 'u8[512]{0}', space=smem, size = 0x200, scoped, tag = 'prefetched SMEM operand 0']
  %s0 = inlined_call_operand.hbm [shape: s32[8], index: 0, kind: input, shape index: {}]
  %s1 = inlined_call_operand.hbm [shape: u32[8,128], index: 1, kind: input, shape index: {}]
  %s2 = inlined_call_operand.hbm [shape: u32[16,128], index: 2, kind: output, shape index: {}]
  %s3 = sld [smem:[#allocation0]]
  $region50: #{tpu_custom_call.1} parent=0
    _
  %s5 = ssub.s32 1, %s3
  %s6 = scalar_select 0, %s5, %s3
  %8 = dma.hbm_to_smem %s0, 16, [#allocation3], [#allocation2]
  %9 = dma.done [#allocation2], 16
  %10 = sfence
  $region1: #{tpu_custom_call.1} parent=0
    #allocation4 [shape = 'u8[4096]{0}', space=vmem, size = 0x1000, scoped, tag = 'input window, operand 1, single buffered']
    #allocation5 [shape = 's32[1]{0}', space=sflag, size = 0x4, scoped, tag = 'scoped memory for tpu_custom_call.1']
    #allocation6 [shape = 's32[1]{0}', space=sflag, size = 0x4, scoped, tag = 'scoped memory for tpu_custom_call.1']
    #allocation7 [shape = 'u8[8192]{0}', space=vmem, size = 0x2000, scoped, tag = 'output window, operand 0, single buffered']
    %11 = vsyncpa [#allocation5], 0
    %12 = vsyncpa [#allocation6], 0
    // Predicated region
    $region2: #{tpu_custom_call.1} parent=1 // pred_check
      _
    $region3: #{tpu_custom_call.1} parent=1 // pred_check_branch
      %14 = sbr.rel (0) target = $region5
    $region4: #{tpu_custom_call.1} parent=1 // pred_region
      %s16 = ssub.s32 128, 128
      %17 = vsyncadd [#allocation5], %s16
      %s19 = sshll.u32 [#allocation4], 4
      %s20 = int_to_ptr.vmem [resolvable:$true] %s19
      %22 = dma.hbm_to_vmem [thread:$0]  %s1, 128, %s20, [#allocation5]
    $region5: #{tpu_custom_call.1} parent=1 // pred_fallthru
      _
    // Predicated region
    $region6: #{tpu_custom_call.1} parent=1 // pred_check
      _
    $region7: #{tpu_custom_call.1} parent=1 // pred_check_branch
      %24 = sbr.rel (0) target = $region9
    $region8: #{tpu_custom_call.1} parent=1 // pred_region
      %25 = dma.done [#allocation5], 128
    $region9: #{tpu_custom_call.1} parent=1 // pred_fallthru
      _
    %26 = vst [vmem:[#allocation7] sm:$0xff] 0
    %27 = vst [vmem:[#allocation7 + $0x8] sm:$0xff] 0
    %s28 = sld [smem:[#allocation3]]
    %p29 = scmp.ge.s32.totalorder %s28, 0
    %p30 = scmp.lt.s32.totalorder %s28, 16
    %p31 = pnand %p29, %p30
    %p32 = pneg %p31
    // Predicated region
    $region10: #{tpu_custom_call.1} parent=1 // pred_check
      _
    $region11: #{tpu_custom_call.1} parent=1 // pred_check_branch
      %34 = sbr.rel (%p31) target = $region13
    $region12: #{tpu_custom_call.1} parent=1 // pred_region
      %v35 = vld [vmem:[#allocation4] sm:$0x1]
      %s36 = scalar_lea.vmem [#allocation7], %s28
      %37 = vst [vmem:[%s36] sm:$0x1] %v35
    $region13: #{tpu_custom_call.1} parent=1 // pred_fallthru
      _
    %s38 = sld [smem:[#allocation3 + $0x1]]
    %p39 = scmp.ge.s32.totalorder %s38, 0
    %p40 = scmp.lt.s32.totalorder %s38, 16
    %p41 = pnand %p39, %p40
    %p42 = pneg %p41
    // Predicated region
    $region14: #{tpu_custom_call.1} parent=1 // pred_check
      _
    $region15: #{tpu_custom_call.1} parent=1 // pred_check_branch
      %44 = sbr.rel (%p41) target = $region17
    $region16: #{tpu_custom_call.1} parent=1 // pred_region
      %v45 = vld [vmem:[#allocation4 + $0x1] sm:$0x1]
      %s46 = scalar_lea.vmem [#allocation7], %s38
      %47 = vst [vmem:[%s46] sm:$0x1] %v45
    $region17: #{tpu_custom_call.1} parent=1 // pred_fallthru
      _
    %s48 = sld [smem:[#allocation3 + $0x2]]
    %p49 = scmp.ge.s32.totalorder %s48, 0
    %p50 = scmp.lt.s32.totalorder %s48, 16
    %p51 = pnand %p49, %p50
    %p52 = pneg %p51
    // Predicated region
    $region18: #{tpu_custom_call.1} parent=1 // pred_check
      _
    $region19: #{tpu_custom_call.1} parent=1 // pred_check_branch
      %54 = sbr.rel (%p51) target = $region21
    $region20: #{tpu_custom_call.1} parent=1 // pred_region
      %v55 = vld [vmem:[#allocation4 + $0x2] sm:$0x1]
      %s56 = scalar_lea.vmem [#allocation7], %s48
      %57 = vst [vmem:[%s56] sm:$0x1] %v55
    $region21: #{tpu_custom_call.1} parent=1 // pred_fallthru
      _
    %s58 = sld [smem:[#allocation3 + $0x3]]
    %p59 = scmp.ge.s32.totalorder %s58, 0
    %p60 = scmp.lt.s32.totalorder %s58, 16
    %p61 = pnand %p59, %p60
    %p62 = pneg %p61
    // Predicated region
    $region22: #{tpu_custom_call.1} parent=1 // pred_check
      _
    $region23: #{tpu_custom_call.1} parent=1 // pred_check_branch
      %64 = sbr.rel (%p61) target = $region25
    $region24: #{tpu_custom_call.1} parent=1 // pred_region
      %v65 = vld [vmem:[#allocation4 + $0x3] sm:$0x1]
      %s66 = scalar_lea.vmem [#allocation7], %s58
      %67 = vst [vmem:[%s66] sm:$0x1] %v65
    $region25: #{tpu_custom_call.1} parent=1 // pred_fallthru
      _
    %s68 = sld [smem:[#allocation3 + $0x4]]
    %p69 = scmp.ge.s32.totalorder %s68, 0
    %p70 = scmp.lt.s32.totalorder %s68, 16
    %p71 = pnand %p69, %p70
    %p72 = pneg %p71
    // Predicated region
    $region26: #{tpu_custom_call.1} parent=1 // pred_check
      _
    $region27: #{tpu_custom_call.1} parent=1 // pred_check_branch
      %74 = sbr.rel (%p71) target = $region29
    $region28: #{tpu_custom_call.1} parent=1 // pred_region
      %v75 = vld [vmem:[#allocation4 + $0x4] sm:$0x1]
      %s76 = scalar_lea.vmem [#allocation7], %s68
      %77 = vst [vmem:[%s76] sm:$0x1] %v75
    $region29: #{tpu_custom_call.1} parent=1 // pred_fallthru
      _
    %s78 = sld [smem:[#allocation3 + $0x5]]
    %p79 = scmp.ge.s32.totalorder %s78, 0
    %p80 = scmp.lt.s32.totalorder %s78, 16
    %p81 = pnand %p79, %p80
    %p82 = pneg %p81
    // Predicated region
    $region30: #{tpu_custom_call.1} parent=1 // pred_check
      _
    $region31: #{tpu_custom_call.1} parent=1 // pred_check_branch
      %84 = sbr.rel (%p81) target = $region33
    $region32: #{tpu_custom_call.1} parent=1 // pred_region
      %v85 = vld [vmem:[#allocation4 + $0x5] sm:$0x1]
      %s86 = scalar_lea.vmem [#allocation7], %s78
      %87 = vst [vmem:[%s86] sm:$0x1] %v85
    $region33: #{tpu_custom_call.1} parent=1 // pred_fallthru
      _
    %s88 = sld [smem:[#allocation3 + $0x6]]
    %p89 = scmp.ge.s32.totalorder %s88, 0
    %p90 = scmp.lt.s32.totalorder %s88, 16
    %p91 = pnand %p89, %p90
    %p92 = pneg %p91
    // Predicated region
    $region34: #{tpu_custom_call.1} parent=1 // pred_check
      _
    $region35: #{tpu_custom_call.1} parent=1 // pred_check_branch
      %94 = sbr.rel (%p91) target = $region37
    $region36: #{tpu_custom_call.1} parent=1 // pred_region
      %v95 = vld [vmem:[#allocation4 + $0x6] sm:$0x1]
      %s96 = scalar_lea.vmem [#allocation7], %s88
      %97 = vst [vmem:[%s96] sm:$0x1] %v95
    $region37: #{tpu_custom_call.1} parent=1 // pred_fallthru
      _
    %s98 = sld [smem:[#allocation3 + $0x7]]
    %p99 = scmp.ge.s32.totalorder %s98, 0
    %p100 = scmp.lt.s32.totalorder %s98, 16
    %p101 = pnand %p99, %p100
    %p102 = pneg %p101
    // Predicated region
    $region38: #{tpu_custom_call.1} parent=1 // pred_check
      _
    $region39: #{tpu_custom_call.1} parent=1 // pred_check_branch
      %104 = sbr.rel (%p101) target = $region41
    $region40: #{tpu_custom_call.1} parent=1 // pred_region
      %v105 = vld [vmem:[#allocation4 + $0x7] sm:$0x1]
      %s106 = scalar_lea.vmem [#allocation7], %s98
      %107 = vst [vmem:[%s106] sm:$0x1] %v105
    $region41: #{tpu_custom_call.1} parent=1 // pred_fallthru
      _
    // Predicated region
    $region42: #{tpu_custom_call.1} parent=1 // pred_check
      _
    $region43: #{tpu_custom_call.1} parent=1 // pred_check_branch
      %109 = sbr.rel (0) target = $region45
    $region44: #{tpu_custom_call.1} parent=1 // pred_region
      %s111 = ssub.s32 256, 256
      %112 = vsyncadd [#allocation6], %s111
      %s113 = sshll.u32 [#allocation7], 4
      %s114 = int_to_ptr.vmem [resolvable:$true] %s113
      %119 = dma.vmem_to_hbm [thread:$0]  %s114, 256, %s2, [#allocation6], 128, 128, 8
    $region45: #{tpu_custom_call.1} parent=1 // pred_fallthru
      _
    // Predicated region
    $region46: #{tpu_custom_call.1} parent=1 // pred_check
      _
    $region47: #{tpu_custom_call.1} parent=1 // pred_check_branch
      %121 = sbr.rel (0) target = $region49
    $region48: #{tpu_custom_call.1} parent=1 // pred_region
      %122 = dma.done [#allocation6], 256
    $region49: #{tpu_custom_call.1} parent=1 // pred_fallthru
      _
    %123 = vsyncpa [#allocation5], 1
    %124 = vsyncpa [#allocation6], 1

</llo_original>
